<compile_context>
chip_gen: v7x
topology: tpu7x:2x2x1
jax: 0.10.0
libtpu: 0.0.40
codegen_flags: <defaults>
</compile_context>

<pallas_src>
import jax
import jax.numpy as jnp
from jax.experimental import pallas as pl
from jax.experimental.pallas import tpu as pltpu


def _round_up(n, m):
    return ((n + m - 1) // m) * m


def mlp_kernel(x_ref, w1_ref, b1_ref, w2_ref, b2_ref, o_ref):
    # Layer 1 (MXU, f32 acc) -> bias + ReLU (VPU) -> Layer 2 (MXU) -> bias.
    x = x_ref[...]                                          # (TB, D_in)
    h = jnp.dot(x, w1_ref[...],
                preferred_element_type=jnp.float32)         # (TB, Hp)
    h = jnp.maximum(h + b1_ref[...], 0.0)                   # bias + ReLU
    out = jnp.dot(h, w2_ref[...],
                  preferred_element_type=jnp.float32)       # (TB, O)
    o_ref[...] = (out + b2_ref[...]).astype(o_ref.dtype)


def pad_params(w1, b1, w2, b2):
    """One-time padding of call-invariant params: hidden dim -> multiple of 128.

    Zero padding keeps the math exact: padded hidden columns are
    relu(0 + 0) = 0 and multiply zero rows of W2.
    """
    D_in, H = w1.shape
    O = w2.shape[1]
    Hp = _round_up(H, 128)
    f32 = jnp.float32
    w1p = jnp.zeros((D_in, Hp), f32).at[:, :H].set(w1.astype(f32))
    b1p = jnp.zeros((1, Hp), f32).at[:, :H].set(b1.astype(f32))
    w2p = jnp.zeros((Hp, O), f32).at[:H, :].set(w2.astype(f32))
    b2p = b2.astype(f32).reshape(1, O)
    return w1p, b1p, w2p, b2p


@jax.jit
def neural_net_forward(x, w1p, b1p, w2p, b2p):
    """Fused MLP forward.

    x: (B, D_in) ; w1p: (D_in, Hp) ; b1p: (1, Hp) ; w2p: (Hp, O) ; b2p: (1, O)
    Returns (B, O) float32.
    """
    B, D_in = x.shape
    Hp = w1p.shape[1]
    O = w2p.shape[1]
    f32 = jnp.float32
    x = x.astype(f32)

    if B <= 128:
        # Tiny problem: gridless, everything VMEM-resident, no pipeline overhead.
        Bp = max(_round_up(B, 8), 8)
        xp = x if Bp == B else jnp.zeros((Bp, D_in), f32).at[:B].set(x)
        out_p = pl.pallas_call(
            mlp_kernel,
            out_shape=jax.ShapeDtypeStruct((Bp, O), f32),
            in_specs=[pl.BlockSpec(memory_space=pltpu.MemorySpace.VMEM)] * 5,
            out_specs=pl.BlockSpec(memory_space=pltpu.MemorySpace.VMEM),
        )(xp, w1p, b1p, w2p, b2p)
    else:
        # Batch-tiled path: x / out streamed at true width, weights resident.
        # At least 2 grid steps (feeds both v7x TensorCores), tile cap 1024 rows.
        block_b = min(1024, _round_up(-(-B // 2), 8))
        Bp = _round_up(B, block_b)
        xp = x if Bp == B else jnp.zeros((Bp, D_in), f32).at[:B].set(x)
        grid = (Bp // block_b,)
        out_p = pl.pallas_call(
            mlp_kernel,
            out_shape=jax.ShapeDtypeStruct((Bp, O), f32),
            grid_spec=pl.GridSpec(
                grid=grid,
                in_specs=[
                    pl.BlockSpec((block_b, D_in), lambda i: (i, 0)),
                    pl.BlockSpec((D_in, Hp), lambda i: (0, 0)),
                    pl.BlockSpec((1, Hp), lambda i: (0, 0)),
                    pl.BlockSpec((Hp, O), lambda i: (0, 0)),
                    pl.BlockSpec((1, O), lambda i: (0, 0)),
                ],
                out_specs=pl.BlockSpec((block_b, O), lambda i: (i, 0)),
            ),
            compiler_params=pltpu.CompilerParams(
                dimension_semantics=("parallel",)),
        )(xp, w1p, b1p, w2p, b2p)

    # Padded batch rows are garbage (relu(b1)@W2+b2) -- sliced off here; the
    # slice fuses under jit.
    return out_p[:B]


def init_params(key, input_size, hidden_size, output_size):
    """Deterministic init mimicking nn.Linear's U(-1/sqrt(fan_in), 1/sqrt(fan_in))."""
    k1, k2, k3, k4 = jax.random.split(key, 4)
    bound1 = 1.0 / jnp.sqrt(input_size)
    bound2 = 1.0 / jnp.sqrt(hidden_size)
    w1 = jax.random.uniform(k1, (input_size, hidden_size), jnp.float32,
                            -bound1, bound1)
    b1 = jax.random.uniform(k2, (1, hidden_size), jnp.float32, -bound1, bound1)
    w2 = jax.random.uniform(k3, (hidden_size, output_size), jnp.float32,
                            -bound2, bound2)
    b2 = jax.random.uniform(k4, (1, output_size), jnp.float32, -bound2, bound2)
    return w1, b1, w2, b2


if __name__ == "__main__":
    # Small shapes consistent with the module: input_size=32, hidden=100
    # (fixed by the module), output_size=16.
    input_size, hidden_size, output_size = 32, 100, 16

    key = jax.random.PRNGKey(0)
    kx1, kx2, kp = jax.random.split(key, 3)
    w1, b1, w2, b2 = init_params(kp, input_size, hidden_size, output_size)
    # One-time padded params (reused across calls).
    w1p, b1p, w2p, b2p = pad_params(w1, b1, w2, b2)

    def ref(x):
        return jnp.maximum(x @ w1 + b1, 0.0) @ w2 + b2

    # Tiny batch -> gridless VMEM path.
    x_small = jax.random.normal(kx1, (8, input_size), jnp.float32)
    out_small = jax.block_until_ready(
        neural_net_forward(x_small, w1p, b1p, w2p, b2p))
    assert out_small.shape == (8, output_size)
    assert jnp.allclose(out_small, ref(x_small), atol=1e-5, rtol=1e-5)

    # Larger batch -> batch-tiled grid path (2 "parallel" grid steps).
    x_big = jax.random.normal(kx2, (384, input_size), jnp.float32)
    out_big = jax.block_until_ready(
        neural_net_forward(x_big, w1p, b1p, w2p, b2p))
    assert out_big.shape == (384, output_size)
    assert jnp.allclose(out_big, ref(x_big), atol=1e-4, rtol=1e-5)

    print("KERNEL_OK")
</pallas_src>

<mosaic_0001>
module attributes {stable_mosaic.version = 11 : i64} {
  func.func @mlp_kernel(%arg0: memref<8x32xf32, #tpu.memory_space<vmem>>, %arg1: memref<32x128xf32, #tpu.memory_space<vmem>>, %arg2: memref<1x128xf32, #tpu.memory_space<vmem>>, %arg3: memref<128x16xf32, #tpu.memory_space<vmem>>, %arg4: memref<1x16xf32, #tpu.memory_space<vmem>>, %arg5: memref<8x16xf32, #tpu.memory_space<vmem>>) attributes {dimension_semantics = [], scalar_prefetch = 0 : i64, scratch_operands = 0 : i64, tpu.core_type = #tpu.core_type<tc>} {
    %c0 = arith.constant 0 : index
    %c0_0 = arith.constant 0 : index
    %0 = vector.load %arg0[%c0, %c0_0] : memref<8x32xf32, #tpu.memory_space<vmem>>, vector<8x32xf32>
    %c0_1 = arith.constant 0 : index
    %c0_2 = arith.constant 0 : index
    %1 = vector.load %arg1[%c0_1, %c0_2] : memref<32x128xf32, #tpu.memory_space<vmem>>, vector<32x128xf32>
    %cst = arith.constant dense<0.000000e+00> : vector<8x128xf32>
    %2 = tpu.matmul %0, %1, %cst {dimension_numbers = #tpu.dot_dimension_numbers<[1], [0], [0], [1], [0, 0, 1, 1], [], []>} : vector<8x32xf32>, vector<32x128xf32>, vector<8x128xf32> -> vector<8x128xf32>
    %c0_3 = arith.constant 0 : index
    %c0_4 = arith.constant 0 : index
    %3 = vector.load %arg2[%c0_3, %c0_4] : memref<1x128xf32, #tpu.memory_space<vmem>>, vector<1x128xf32>
    %4 = vector.broadcast %3 : vector<1x128xf32> to vector<8x128xf32>
    %5 = arith.addf %2, %4 : vector<8x128xf32>
    %cst_5 = arith.constant 0.000000e+00 : f32
    %6 = vector.broadcast %cst_5 : f32 to vector<8x128xf32>
    %7 = arith.maximumf %5, %6 : vector<8x128xf32>
    %c0_6 = arith.constant 0 : index
    %c0_7 = arith.constant 0 : index
    %8 = vector.load %arg3[%c0_6, %c0_7] : memref<128x16xf32, #tpu.memory_space<vmem>>, vector<128x16xf32>
    %cst_8 = arith.constant dense<0.000000e+00> : vector<8x16xf32>
    %9 = tpu.matmul %7, %8, %cst_8 {dimension_numbers = #tpu.dot_dimension_numbers<[1], [0], [0], [1], [0, 0, 1, 1], [], []>} : vector<8x128xf32>, vector<128x16xf32>, vector<8x16xf32> -> vector<8x16xf32>
    %c0_9 = arith.constant 0 : index
    %c0_10 = arith.constant 0 : index
    %10 = vector.load %arg4[%c0_9, %c0_10] : memref<1x16xf32, #tpu.memory_space<vmem>>, vector<1x16xf32>
    %11 = vector.broadcast %10 : vector<1x16xf32> to vector<8x16xf32>
    %12 = arith.addf %9, %11 : vector<8x16xf32>
    %c0_11 = arith.constant 0 : index
    %c0_12 = arith.constant 0 : index
    %13 = vector.load %arg5[%c0_11, %c0_12] : memref<8x16xf32, #tpu.memory_space<vmem>>, vector<8x16xf32>
    tpu.vector_store %arg5[%c0_11, %c0_12], %12 {strides = array<i32>} : memref<8x16xf32, #tpu.memory_space<vmem>>, vector<8x16xf32>,
    return
  }
}

</mosaic_0001>

<llo_original>
// kernel: neural_net_forward.1
$region0: #{neural_net_forward.1}
  #allocation0 [shape = 'u32[]', space=smem, size = 0x4, offset = 0x4, fixed_abs, tag = 'smem constant byte address 0x4 - core index']
  #allocation1 [shape = 'u32[144,128]{1,0:T(1,128)}', space=vmem, size = 0x12000, scoped, tag = 'internal scratch']
  %s0 = inlined_call_operand.vmem [shape: f32[8,32], index: 0, kind: input, shape index: {}]
  %s1 = inlined_call_operand.vmem [shape: f32[32,128], index: 1, kind: input, shape index: {}]
  %s2 = inlined_call_operand.vmem [shape: f32[1,128], index: 2, kind: input, shape index: {}]
  %s3 = inlined_call_operand.vmem [shape: f32[128,16], index: 3, kind: input, shape index: {}]
  %s4 = inlined_call_operand.vmem [shape: f32[1,16], index: 4, kind: input, shape index: {}]
  %s5 = inlined_call_operand.hbm [shape: f32[8,16], index: 5, kind: output, shape index: {}]
  %s6 = sld [smem:[#allocation0]]
  $region30: #{neural_net_forward.1} parent=0
    _
  %s8 = ssub.s32 1, %s6
  %s9 = scalar_select 0, %s8, %s6
  $region1: #{neural_net_forward.1} parent=0
    #allocation2 [shape = 'u8[4096]{0}', space=vmem, size = 0x1000, scoped, tag = 'output window, operand 0, single buffered']
    #allocation3 [shape = 's32[1]{0}', space=sflag, size = 0x4, scoped, tag = 'scoped memory for neural_net_forward.1']
    %10 = vsyncpa [#allocation3], 0
    // Predicated region
    $region2: #{neural_net_forward.1} parent=1 // pred_check
      _
    $region3: #{neural_net_forward.1} parent=1 // pred_check_branch
      %12 = sbr.rel (0) target = $region5
    $region4: #{neural_net_forward.1} parent=1 // pred_region
      _
    $region5: #{neural_net_forward.1} parent=1 // pred_fallthru
      _
    // Predicated region
    $region6: #{neural_net_forward.1} parent=1 // pred_check
      _
    $region7: #{neural_net_forward.1} parent=1 // pred_check_branch
      %14 = sbr.rel (0) target = $region9
    $region8: #{neural_net_forward.1} parent=1 // pred_region
      _
    $region9: #{neural_net_forward.1} parent=1 // pred_fallthru
      _
    // Predicated region
    $region10: #{neural_net_forward.1} parent=1 // pred_check
      _
    $region11: #{neural_net_forward.1} parent=1 // pred_check_branch
      %16 = sbr.rel (0) target = $region13
    $region12: #{neural_net_forward.1} parent=1 // pred_region
      _
    $region13: #{neural_net_forward.1} parent=1 // pred_fallthru
      _
    // Predicated region
    $region14: #{neural_net_forward.1} parent=1 // pred_check
      _
    $region15: #{neural_net_forward.1} parent=1 // pred_check_branch
      %18 = sbr.rel (0) target = $region17
    $region16: #{neural_net_forward.1} parent=1 // pred_region
      _
    $region17: #{neural_net_forward.1} parent=1 // pred_fallthru
      _
    // Predicated region
    $region18: #{neural_net_forward.1} parent=1 // pred_check
      _
    $region19: #{neural_net_forward.1} parent=1 // pred_check_branch
      %20 = sbr.rel (0) target = $region21
    $region20: #{neural_net_forward.1} parent=1 // pred_region
      _
    $region21: #{neural_net_forward.1} parent=1 // pred_fallthru
      _
    %v21 = vld [vmem:[%s0] sm:$0xff]
    %v22 = vld [vmem:[%s1] sm:$0xff]
    %v23 = vld [vmem:[%s1 + $0x8] sm:$0xff]
    %v24 = vld [vmem:[%s1 + $0x10] sm:$0xff]
    %v25 = vld [vmem:[%s1 + $0x18] sm:$0xff]
    %v26 = vld [vmem:[%s2] sm:$0x1]
    %v28 = vlaneseq
    %v29 = vshrl.u32 %v28, 7
    %v30 = vsub.s32 0, %v29
    %v31 = vrot.slane %v26, %v30
    %vm33 = vcmask 261120
    %v35 = vsel %vm33, %v21, 0
    %37 = vmatprep.subr.mxu0 0.0
    %38 = vmatpush1.msra.mxu0 %v22
    %39 = vmatprep.subr.mxu0 0.0
    %40 = vmatpush1.msra.mxu0 %v23
    %41 = vmatprep.subr.mxu0 0.0
    %42 = vmatpush1.msra.mxu0 %v24
    %43 = vmatprep.subr.mxu0 0.0
    %44 = vmatpush1.msra.mxu0 %v25
    %45 = vmatprep.subr.mxu0 0.0
    %46 = vmatpush1.msra.mxu0 0.0
    %47 = vmatprep.subr.mxu0 0.0
    %48 = vmatpush1.msra.mxu0 0.0
    %49 = vmatprep.subr.mxu0 0.0
    %50 = vmatpush1.msra.mxu0 0.0
    %51 = vmatprep.subr.mxu0 0.0
    %52 = vmatpush1.msra.mxu0 0.0
    %53 = vmatprep.subr.mxu0 0.0
    %54 = vmatpush1.msra.mxu0 0.0
    %55 = vmatprep.subr.mxu0 0.0
    %56 = vmatpush1.msra.mxu0 0.0
    %57 = vmatprep.subr.mxu0 0.0
    %58 = vmatpush1.msra.mxu0 0.0
    %59 = vmatprep.subr.mxu0 0.0
    %60 = vmatpush1.msra.mxu0 0.0
    %61 = vmatprep.subr.mxu0 0.0
    %62 = vmatpush1.msra.mxu0 0.0
    %63 = vmatprep.subr.mxu0 0.0
    %64 = vmatpush1.msra.mxu0 0.0
    %65 = vmatprep.subr.mxu0 0.0
    %66 = vmatpush1.msra.mxu0 0.0
    %67 = vmatprep.subr.mxu0 0.0
    %68 = vmatpush1.msra.mxu0 0.0
    %69 = vmatprep.subr.mxu0 0.0
    %70 = vmatpush1.msra.mxu0 0.0
    %71 = vmatprep.subr.mxu0 0.0
    %72 = vmatpush1.msra.mxu0 0.0
    %73 = vmatprep.subr.mxu0 0.0
    %74 = vmatpush1.msra.mxu0 0.0
    %75 = vmatprep.subr.mxu0 0.0
    %76 = vmatpush1.msra.mxu0 0.0
    %77 = vmatprep.subr.mxu0 0.0
    %78 = vmatpush1.msra.mxu0 0.0
    %79 = vmatprep.subr.mxu0 0.0
    %80 = vmatpush1.msra.mxu0 0.0
    %81 = vmatprep.subr.mxu0 0.0
    %82 = vmatpush1.msra.mxu0 0.0
    %83 = vmatprep.subr.mxu0 0.0
    %84 = vmatpush1.msra.mxu0 0.0
    %85 = vmatprep.subr.mxu0 0.0
    %86 = vmatpush1.msra.mxu0 0.0
    %87 = vmatprep.subr.mxu0 0.0
    %88 = vmatpush1.msra.mxu0 0.0
    %89 = vmatprep.subr.mxu0 0.0
    %90 = vmatpush1.msra.mxu0 0.0
    %91 = vmatprep.subr.mxu0 0.0
    %92 = vmatpush1.msra.mxu0 0.0
    %93 = vmatprep.subr.mxu0 0.0
    %94 = vmatpush1.msra.mxu0 0.0
    %95 = vmatprep.subr.mxu0 0.0
    %96 = vmatpush1.msra.mxu0 0.0
    %97 = vmatprep.subr.mxu0 0.0
    %98 = vmatpush1.msra.mxu0 0.0
    %99 = vmatprep.subr.mxu0 0.0
    %100 = vmatpush1.msra.mxu0 0.0
    %101 = vmatprep.mubr.f32.mxu0 0.0
    %102 = vmatmul.mubr.f32.gmra.mrb[0].mxu0 %v35
    %v103 = vpop.f32.mrb[0].mxu0
    %v104 = vadd.f32 %v31, %v103
    %v105 = vpop.f32.mrb[0].mxu0
    %106 = vdwg.mxu0
    %v107 = vmax.f32 %v104, 0.0
    %v108 = vld [vmem:[%s3] sm:$0xff]
    %v109 = vld [vmem:[%s3 + $0x8] sm:$0xff]
    %v110 = vld [vmem:[%s3 + $0x10] sm:$0xff]
    %v111 = vld [vmem:[%s3 + $0x18] sm:$0xff]
    %v112 = vld [vmem:[%s3 + $0x20] sm:$0xff]
    %v113 = vld [vmem:[%s3 + $0x28] sm:$0xff]
    %v114 = vld [vmem:[%s3 + $0x30] sm:$0xff]
    %v115 = vld [vmem:[%s3 + $0x38] sm:$0xff]
    %v116 = vld [vmem:[%s3 + $0x40] sm:$0xff]
    %v117 = vld [vmem:[%s3 + $0x48] sm:$0xff]
    %v118 = vld [vmem:[%s3 + $0x50] sm:$0xff]
    %v119 = vld [vmem:[%s3 + $0x58] sm:$0xff]
    %v120 = vld [vmem:[%s3 + $0x60] sm:$0xff]
    %v121 = vld [vmem:[%s3 + $0x68] sm:$0xff]
    %v122 = vld [vmem:[%s3 + $0x70] sm:$0xff]
    %v123 = vld [vmem:[%s3 + $0x78] sm:$0xff]
    %v124 = vld [vmem:[%s4] sm:$0x1]
    %v126 = vlaneseq
    %v127 = vshrl.u32 %v126, 7
    %v128 = vsub.s32 0, %v127
    %v129 = vrot.slane %v124, %v128
    %131 = vmatprep.subr.mxu0 0.0
    %132 = vmatpush1.msra.mxu0 %v108
    %133 = vmatprep.subr.mxu0 0.0
    %134 = vmatpush1.msra.mxu0 %v109
    %135 = vmatprep.subr.mxu0 0.0
    %136 = vmatpush1.msra.mxu0 %v110
    %137 = vmatprep.subr.mxu0 0.0
    %138 = vmatpush1.msra.mxu0 %v111
    %139 = vmatprep.subr.mxu0 0.0
    %140 = vmatpush1.msra.mxu0 %v112
    %141 = vmatprep.subr.mxu0 0.0
    %142 = vmatpush1.msra.mxu0 %v113
    %143 = vmatprep.subr.mxu0 0.0
    %144 = vmatpush1.msra.mxu0 %v114
    %145 = vmatprep.subr.mxu0 0.0
    %146 = vmatpush1.msra.mxu0 %v115
    %147 = vmatprep.subr.mxu0 0.0
    %148 = vmatpush1.msra.mxu0 %v116
    %149 = vmatprep.subr.mxu0 0.0
    %150 = vmatpush1.msra.mxu0 %v117
    %151 = vmatprep.subr.mxu0 0.0
    %152 = vmatpush1.msra.mxu0 %v118
    %153 = vmatprep.subr.mxu0 0.0
    %154 = vmatpush1.msra.mxu0 %v119
    %155 = vmatprep.subr.mxu0 0.0
    %156 = vmatpush1.msra.mxu0 %v120
    %157 = vmatprep.subr.mxu0 0.0
    %158 = vmatpush1.msra.mxu0 %v121
    %159 = vmatprep.subr.mxu0 0.0
    %160 = vmatpush1.msra.mxu0 %v122
    %161 = vmatprep.subr.mxu0 0.0
    %162 = vmatpush1.msra.mxu0 %v123
    %163 = vmatprep.subr.mxu0 0.0
    %164 = vmatpush1.msra.mxu0 0.0
    %165 = vmatprep.subr.mxu0 0.0
    %166 = vmatpush1.msra.mxu0 0.0
    %167 = vmatprep.subr.mxu0 0.0
    %168 = vmatpush1.msra.mxu0 0.0
    %169 = vmatprep.subr.mxu0 0.0
    %170 = vmatpush1.msra.mxu0 0.0
    %171 = vmatprep.subr.mxu0 0.0
    %172 = vmatpush1.msra.mxu0 0.0
    %173 = vmatprep.subr.mxu0 0.0
    %174 = vmatpush1.msra.mxu0 0.0
    %175 = vmatprep.subr.mxu0 0.0
    %176 = vmatpush1.msra.mxu0 0.0
    %177 = vmatprep.subr.mxu0 0.0
    %178 = vmatpush1.msra.mxu0 0.0
    %179 = vmatprep.subr.mxu0 0.0
    %180 = vmatpush1.msra.mxu0 0.0
    %181 = vmatprep.subr.mxu0 0.0
    %182 = vmatpush1.msra.mxu0 0.0
    %183 = vmatprep.subr.mxu0 0.0
    %184 = vmatpush1.msra.mxu0 0.0
    %185 = vmatprep.subr.mxu0 0.0
    %186 = vmatpush1.msra.mxu0 0.0
    %187 = vmatprep.subr.mxu0 0.0
    %188 = vmatpush1.msra.mxu0 0.0
    %189 = vmatprep.subr.mxu0 0.0
    %190 = vmatpush1.msra.mxu0 0.0
    %191 = vmatprep.subr.mxu0 0.0
    %192 = vmatpush1.msra.mxu0 0.0
    %193 = vmatprep.subr.mxu0 0.0
    %194 = vmatpush1.msra.mxu0 0.0
    %195 = vmatprep.mubr.f32.mxu0 0.0
    %196 = vmatmul.mubr.f32.gmra.mrb[0].mxu0 %v107
    %v197 = vpop.f32.mrb[0].mxu0
    %v198 = vadd.f32 %v129, %v197
    %v199 = vpop.f32.mrb[0].mxu0
    %200 = vdwg.mxu0
    %vm201 = vcmask 130048
    %202 = vst.msk [vmem:[#allocation2] sm:$0xff] %vm201, %v198
    // Predicated region
    $region22: #{neural_net_forward.1} parent=1 // pred_check
      _
    $region23: #{neural_net_forward.1} parent=1 // pred_check_branch
      %204 = sbr.rel (0) target = $region25
    $region24: #{neural_net_forward.1} parent=1 // pred_region
      %s206 = ssub.s32 128, 128
      %207 = vsyncadd [#allocation3], %s206
      %s209 = sshll.u32 [#allocation2], 4
      %s210 = int_to_ptr.vmem [resolvable:$true] %s209
      %212 = dma.vmem_to_hbm [thread:$0]  %s210, 128, %s5, [#allocation3]
    $region25: #{neural_net_forward.1} parent=1 // pred_fallthru
      _
    // Predicated region
    $region26: #{neural_net_forward.1} parent=1 // pred_check
      _
    $region27: #{neural_net_forward.1} parent=1 // pred_check_branch
      %214 = sbr.rel (0) target = $region29
    $region28: #{neural_net_forward.1} parent=1 // pred_region
      %215 = dma.done [#allocation3], 128
    $region29: #{neural_net_forward.1} parent=1 // pred_fallthru
      _
    %216 = vsyncpa [#allocation3], 1

</llo_original>
